<compile_context>
chip_gen: v6e
topology: v6e:2x2x1
jax: 0.10.0
libtpu: 0.0.40
codegen_flags: <defaults>
</compile_context>

<pallas_src>
import functools
import math

import jax
import jax.numpy as jnp
from jax.experimental import pallas as pl
from jax.experimental.pallas import tpu as pltpu


def _noisy_linear_kernel(
    x_ref,        # (B, tk) or (B, pad_in)   float32
    mu_wT_ref,    # (tk, tn)                 w_dtype   mu_weight^T tile
    sg_wT_ref,    # (tk, tn)                 w_dtype   sigma_weight^T tile
    mu_b_ref,     # (1, tn)                  float32
    sg_b_ref,     # (1, tn)                  float32
    eps_i_ref,    # (1, tk) or (1, pad_in)   float32   already f(e)-transformed
    eps_j_ref,    # (1, tn)                  float32   already f(e)-transformed
    o_ref,        # (B, tn)                  float32
    acc_mu_ref,   # (B, tn)                  float32   VMEM scratch (K accumulator)
    acc_sg_ref,   # (B, tn)                  float32   VMEM scratch (K accumulator)
    *, tk, x_resident,
):
    k = pl.program_id(1)

    @pl.when(k == 0)
    def _():
        acc_mu_ref[...] = jnp.zeros_like(acc_mu_ref)
        acc_sg_ref[...] = jnp.zeros_like(acc_sg_ref)

    if x_resident:
        # x / eps_i are VMEM-resident across the whole K axis; slice the k-chunk here.
        off = pl.multiple_of(k * tk, 128)
        x = x_ref[:, pl.ds(off, tk)]
        eps_i = eps_i_ref[:, pl.ds(off, tk)]
    else:
        x = x_ref[...]
        eps_i = eps_i_ref[...]

    w_dt = mu_wT_ref.dtype
    # Two MXU matmuls; eps_j is applied once at finalize (not per K step).
    acc_mu_ref[...] += jnp.dot(x.astype(w_dt), mu_wT_ref[...],
                               preferred_element_type=jnp.float32)
    acc_sg_ref[...] += jnp.dot((x * eps_i).astype(w_dt), sg_wT_ref[...],
                               preferred_element_type=jnp.float32)

    @pl.when(k == pl.num_programs(1) - 1)
    def _():
        eps_j = eps_j_ref[...]                              # (1, tn)
        bias = mu_b_ref[...] + sg_b_ref[...] * eps_j        # (1, tn)
        o_ref[...] = (acc_mu_ref[...] + eps_j * acc_sg_ref[...] + bias
                      ).astype(o_ref.dtype)


def _round_up(x, m):
    return ((x + m - 1) // m) * m


def _tile_divisors(dim):
    # Multiples of 128 that evenly divide `dim`, descending.  `dim` is 128-aligned.
    return [t for t in range(dim, 0, -128) if dim % t == 0]


def _working_set_bytes(B, tk, tn, pad_in, w_bytes, x_resident):
    wt = 2 * (2 * tk * tn * w_bytes)                       # mu_wT + sg_wT, double-buffered
    xb = 2 * B * (pad_in if x_resident else tk) * 4        # x
    ob = 2 * B * tn * 4                                    # output
    acc = 2 * B * tn * 4                                   # two f32 accumulators
    vec = 2 * 4 * (3 * tn + (pad_in if x_resident else tk))  # biases + eps rows
    return wt + xb + ob + acc + vec


def _choose_tiles(B, pad_in, pad_out, w_bytes, budget_bytes, x_resident_cap):
    best = None
    for tn in _tile_divisors(pad_out):
        n_tiles = pad_out // tn
        for tk in _tile_divisors(pad_in):
            x_res = (n_tiles > 1) and (2 * B * pad_in * 4 <= x_resident_cap)
            ws = _working_set_bytes(B, tk, tn, pad_in, w_bytes, x_res)
            if ws > budget_bytes:
                continue
            # Prefer: single N tile or an even N-tile count (balanced across v7x's
            # two cores), then the largest lane-dense tn, then the largest tk.
            key = ((n_tiles == 1) or (n_tiles % 2 == 0), tn, tk)
            if best is None or key > best[0]:
                best = (key, tk, tn, x_res)
    if best is None:        # tiny fallback; realistic NoisyLinear sizes never hit this
        return 128, 128, False
    return best[1], best[2], best[3]


def factorized_noisy_linear(x, mu_wT, sigma_wT, mu_b, sigma_b,
                            epsilon_i, epsilon_j, *,
                            w_dtype=jnp.bfloat16, tk=None, tn=None,
                            vmem_budget_bytes=40 << 20):
    """Training-mode forward of FactorizedNoisyLinear.

    x:         (B, num_in)        float32
    mu_wT:     (num_in, num_out)  mu_weight pre-transposed (done once at init)
    sigma_wT:  (num_in, num_out)  sigma_weight pre-transposed
    mu_b:      (num_out,)
    sigma_b:   (num_out,)
    epsilon_i: (num_in,)   f(e)=sign(e)*sqrt(|e|) already applied (reset_noise)
    epsilon_j: (num_out,)  f(e) already applied
    returns:   (B, num_out) float32
    """
    B, num_in = x.shape
    assert mu_wT.shape[0] == num_in
    num_out = mu_wT.shape[1]

    # Stream weights in a narrow dtype (HBM-bandwidth bound workload); keep f32 accum.
    mu_wT = mu_wT.astype(w_dtype)
    sigma_wT = sigma_wT.astype(w_dtype)
    w_bytes = jnp.dtype(w_dtype).itemsize

    # Pad K / N to multiples of 128 for lane-dense, unmasked tiles.
    pad_in = _round_up(num_in, 128)
    pad_out = _round_up(num_out, 128)
    if pad_in != num_in:
        dk = pad_in - num_in
        x = jnp.pad(x, ((0, 0), (0, dk)))
        mu_wT = jnp.pad(mu_wT, ((0, dk), (0, 0)))
        sigma_wT = jnp.pad(sigma_wT, ((0, dk), (0, 0)))
        epsilon_i = jnp.pad(epsilon_i, (0, dk))
    if pad_out != num_out:
        dn = pad_out - num_out
        mu_wT = jnp.pad(mu_wT, ((0, 0), (0, dn)))
        sigma_wT = jnp.pad(sigma_wT, ((0, 0), (0, dn)))
        mu_b = jnp.pad(mu_b, (0, dn))
        sigma_b = jnp.pad(sigma_b, (0, dn))
        epsilon_j = jnp.pad(epsilon_j, (0, dn))

    x_resident_cap = 8 << 20   # keep x K-resident only if it costs < 8 MiB of VMEM
    if tk is None or tn is None:
        a_tk, a_tn, x_resident = _choose_tiles(B, pad_in, pad_out, w_bytes,
                                               vmem_budget_bytes, x_resident_cap)
        tk = tk if tk is not None else a_tk
        tn = tn if tn is not None else a_tn
    assert pad_in % tk == 0 and pad_out % tn == 0
    n_tiles = pad_out // tn
    x_resident = (n_tiles > 1) and (2 * B * pad_in * 4 <= x_resident_cap)

    ws = _working_set_bytes(B, tk, tn, pad_in, w_bytes, x_resident)
    vmem_limit = int(min(max(int(ws * 1.3) + (1 << 20), 16 << 20), 60 << 20))

    # 2-D VMEM layout for the small vectors (lane-dense rows).
    mu_b2 = mu_b.astype(jnp.float32).reshape(1, pad_out)
    sg_b2 = sigma_b.astype(jnp.float32).reshape(1, pad_out)
    eps_i2 = epsilon_i.astype(jnp.float32).reshape(1, pad_in)
    eps_j2 = epsilon_j.astype(jnp.float32).reshape(1, pad_out)

    if x_resident:
        x_spec = pl.BlockSpec((B, pad_in), lambda j, k: (0, 0))
        eps_i_spec = pl.BlockSpec((1, pad_in), lambda j, k: (0, 0))
    else:
        x_spec = pl.BlockSpec((B, tk), lambda j, k: (0, k))
        eps_i_spec = pl.BlockSpec((1, tk), lambda j, k: (0, k))

    grid = (n_tiles, pad_in // tk)   # (N tiles "parallel", K tiles "arbitrary" = last)

    kernel = functools.partial(_noisy_linear_kernel, tk=tk, x_resident=x_resident)

    out = pl.pallas_call(
        kernel,
        out_shape=jax.ShapeDtypeStruct((B, pad_out), jnp.float32),
        grid=grid,
        in_specs=[
            x_spec,                                          # x
            pl.BlockSpec((tk, tn), lambda j, k: (k, j)),     # mu_wT
            pl.BlockSpec((tk, tn), lambda j, k: (k, j)),     # sigma_wT
            pl.BlockSpec((1, tn), lambda j, k: (0, j)),      # mu_b
            pl.BlockSpec((1, tn), lambda j, k: (0, j)),      # sigma_b
            eps_i_spec,                                      # epsilon_i
            pl.BlockSpec((1, tn), lambda j, k: (0, j)),      # epsilon_j
        ],
        out_specs=pl.BlockSpec((B, tn), lambda j, k: (0, j)),
        scratch_shapes=[pltpu.VMEM((B, tn), jnp.float32),
                        pltpu.VMEM((B, tn), jnp.float32)],
        compiler_params=pltpu.CompilerParams(
            dimension_semantics=("parallel", "arbitrary"),
            vmem_limit_bytes=vmem_limit,
        ),
    )(x, mu_wT, sigma_wT, mu_b2, sg_b2, eps_i2, eps_j2)

    if pad_out != num_out:
        out = out[:, :num_out]
    return out


def _reference(x, mu_w, sigma_w, mu_b, sigma_b, eps_i, eps_j):
    # eps_i / eps_j already f(e)-transformed (as the module's buffers are).
    w = mu_w + sigma_w * jnp.outer(eps_j, eps_i)
    b = mu_b + sigma_b * eps_j
    return x @ w.T + b


def _run_case(key, batch, num_in, num_out, *, w_dtype, atol, rtol, tk=None, tn=None):
    k_x, k_muw, k_mub, k_ei, k_ej = jax.random.split(key, 5)

    # reset_parameters():
    std = 1.0 / math.sqrt(num_in)
    mu_w = jax.random.uniform(k_muw, (num_out, num_in), jnp.float32, -std, std)
    mu_b = jax.random.uniform(k_mub, (num_out,), jnp.float32, -std, std)
    sigma_w = jnp.full((num_out, num_in), 0.5 / math.sqrt(num_in), jnp.float32)
    sigma_b = jnp.full((num_out,), 0.5 / math.sqrt(num_in), jnp.float32)

    # reset_noise(): draw and apply f(e) = sign(e)*sqrt(|e|) ONCE (hoisted out of kernel)
    f = lambda e: jnp.sign(e) * jnp.sqrt(jnp.abs(e))
    eps_i = f(jax.random.normal(k_ei, (num_in,), jnp.float32))
    eps_j = f(jax.random.normal(k_ej, (num_out,), jnp.float32))

    x = jax.random.normal(k_x, (batch, num_in), jnp.float32)

    # Pre-transpose ONCE (outside the hot path), as the params would be stored at init.
    mu_wT = mu_w.T
    sigma_wT = sigma_w.T

    y = factorized_noisy_linear(x, mu_wT, sigma_wT, mu_b, sigma_b,
                                eps_i, eps_j, w_dtype=w_dtype, tk=tk, tn=tn)
    y = jax.block_until_ready(y)

    y_ref = _reference(x, mu_w, sigma_w, mu_b, sigma_b, eps_i, eps_j)
    assert y.shape == (batch, num_out)
    assert jnp.allclose(y, y_ref, atol=atol, rtol=rtol), "mismatch vs reference"


if __name__ == "__main__":
    key = jax.random.PRNGKey(0)
    k1, k2, k3 = jax.random.split(key, 3)

    # Case 1: forced small tiles -> real (3 N-tiles x 2 K-tiles) grid; exercises the
    # pl.when K-accumulator path, the x-K-resident path, and bf16 weight streaming.
    _run_case(k1, batch=8, num_in=256, num_out=384, tk=128, tn=128,
              w_dtype=jnp.bfloat16, atol=5e-2, rtol=5e-2)

    # Case 2: non-128-multiple sizes -> padding path; auto tiles (single grid step).
    _run_case(k2, batch=4, num_in=200, num_out=120,
              w_dtype=jnp.bfloat16, atol=5e-2, rtol=5e-2)

    # Case 3: f32 weight streaming -> tight-tolerance exactness check of the algebra.
    _run_case(k3, batch=4, num_in=256, num_out=256,
              w_dtype=jnp.float32, atol=1e-4, rtol=1e-4)

    print("KERNEL_OK")
</pallas_src>

<mosaic_0001>
module attributes {stable_mosaic.version = 11 : i64} {
  func.func @_noisy_linear_kernel(%arg0: i32, %arg1: i32, %arg2: memref<8x256xf32, #tpu.memory_space<vmem>>, %arg3: memref<128x128xbf16, #tpu.memory_space<vmem>>, %arg4: memref<128x128xbf16, #tpu.memory_space<vmem>>, %arg5: memref<1x128xf32, #tpu.memory_space<vmem>>, %arg6: memref<1x128xf32, #tpu.memory_space<vmem>>, %arg7: memref<1x256xf32, #tpu.memory_space<vmem>>, %arg8: memref<1x128xf32, #tpu.memory_space<vmem>>, %arg9: memref<8x128xf32, #tpu.memory_space<vmem>>, %arg10: memref<8x128xf32, #tpu.memory_space<vmem>>, %arg11: memref<8x128xf32, #tpu.memory_space<vmem>>) attributes {dimension_semantics = [#tpu.dimension_semantics<parallel>, #tpu.dimension_semantics<arbitrary>], iteration_bounds = array<i64: 3, 2>, scalar_prefetch = 0 : i64, scratch_operands = 2 : i64, tpu.core_type = #tpu.core_type<tc>, window_params = [{pipeline_mode = #tpu.pipeline_mode<synchronous>, transform_indices = @transform_0, window_bounds = array<i64: 8, 256>}, {transform_indices = @transform_1, window_bounds = array<i64: 128, 128>}, {transform_indices = @transform_2, window_bounds = array<i64: 128, 128>}, {transform_indices = @transform_3, window_bounds = array<i64: 1, 128>}, {transform_indices = @transform_4, window_bounds = array<i64: 1, 128>}, {pipeline_mode = #tpu.pipeline_mode<synchronous>, transform_indices = @transform_5, window_bounds = array<i64: 1, 256>}, {transform_indices = @transform_6, window_bounds = array<i64: 1, 128>}, {transform_indices = @transform_7, window_bounds = array<i64: 8, 128>}]} {
    %c0_i32 = arith.constant 0 : i32
    %0 = arith.cmpi eq, %arg1, %c0_i32 : i32
    %1 = arith.extui %0 : i1 to i32
    %c0_i32_0 = arith.constant 0 : i32
    %2 = arith.cmpi ne, %1, %c0_i32_0 : i32
    scf.if %2 {
      %cst_16 = arith.constant 0.000000e+00 : f32
      %26 = vector.broadcast %cst_16 : f32 to vector<8x128xf32>
      %c0_17 = arith.constant 0 : index
      %c0_18 = arith.constant 0 : index
      %27 = vector.load %arg10[%c0_17, %c0_18] : memref<8x128xf32, #tpu.memory_space<vmem>>, vector<8x128xf32>
      tpu.vector_store %arg10[%c0_17, %c0_18], %26 {strides = array<i32>} : memref<8x128xf32, #tpu.memory_space<vmem>>, vector<8x128xf32>,
      %cst_19 = arith.constant 0.000000e+00 : f32
      %28 = vector.broadcast %cst_19 : f32 to vector<8x128xf32>
      %c0_20 = arith.constant 0 : index
      %c0_21 = arith.constant 0 : index
      %29 = vector.load %arg11[%c0_20, %c0_21] : memref<8x128xf32, #tpu.memory_space<vmem>>, vector<8x128xf32>
      tpu.vector_store %arg11[%c0_20, %c0_21], %28 {strides = array<i32>} : memref<8x128xf32, #tpu.memory_space<vmem>>, vector<8x128xf32>,
    } else {
    }
    %c128_i32 = arith.constant 128 : i32
    %3 = arith.muli %arg1, %c128_i32 : i32
    %4 = tpu.assume_multiple %3, 128 : i32
    %c0 = arith.constant 0 : index
    %5 = arith.index_cast %4 : i32 to index
    %6 = vector.load %arg2[%c0, %5] : memref<8x256xf32, #tpu.memory_space<vmem>>, vector<8x128xf32>
    %c0_1 = arith.constant 0 : index
    %7 = arith.index_cast %4 : i32 to index
    %8 = vector.load %arg7[%c0_1, %7] : memref<1x256xf32, #tpu.memory_space<vmem>>, vector<1x128xf32>
    %c0_2 = arith.constant 0 : index
    %c0_3 = arith.constant 0 : index
    %9 = vector.load %arg10[%c0_2, %c0_3] : memref<8x128xf32, #tpu.memory_space<vmem>>, vector<8x128xf32>
    %10 = arith.truncf %6 : vector<8x128xf32> to vector<8x128xbf16>
    %c0_4 = arith.constant 0 : index
    %c0_5 = arith.constant 0 : index
    %11 = vector.load %arg3[%c0_4, %c0_5] : memref<128x128xbf16, #tpu.memory_space<vmem>>, vector<128x128xbf16>
    %cst = arith.constant dense<0.000000e+00> : vector<8x128xf32>
    %12 = tpu.matmul %10, %11, %cst {dimension_numbers = #tpu.dot_dimension_numbers<[1], [0], [0], [1], [0, 0, 1, 1], [], []>} : vector<8x128xbf16>, vector<128x128xbf16>, vector<8x128xf32> -> vector<8x128xf32>
    %13 = arith.addf %9, %12 : vector<8x128xf32>
    %c0_6 = arith.constant 0 : index
    %c0_7 = arith.constant 0 : index
    %14 = vector.load %arg10[%c0_6, %c0_7] : memref<8x128xf32, #tpu.memory_space<vmem>>, vector<8x128xf32>
    tpu.vector_store %arg10[%c0_6, %c0_7], %13 {strides = array<i32>} : memref<8x128xf32, #tpu.memory_space<vmem>>, vector<8x128xf32>,
    %c0_8 = arith.constant 0 : index
    %c0_9 = arith.constant 0 : index
    %15 = vector.load %arg11[%c0_8, %c0_9] : memref<8x128xf32, #tpu.memory_space<vmem>>, vector<8x128xf32>
    %16 = vector.broadcast %8 : vector<1x128xf32> to vector<8x128xf32>
    %17 = arith.mulf %6, %16 : vector<8x128xf32>
    %18 = arith.truncf %17 : vector<8x128xf32> to vector<8x128xbf16>
    %c0_10 = arith.constant 0 : index
    %c0_11 = arith.constant 0 : index
    %19 = vector.load %arg4[%c0_10, %c0_11] : memref<128x128xbf16, #tpu.memory_space<vmem>>, vector<128x128xbf16>
    %cst_12 = arith.constant dense<0.000000e+00> : vector<8x128xf32>
    %20 = tpu.matmul %18, %19, %cst_12 {dimension_numbers = #tpu.dot_dimension_numbers<[1], [0], [0], [1], [0, 0, 1, 1], [], []>} : vector<8x128xbf16>, vector<128x128xbf16>, vector<8x128xf32> -> vector<8x128xf32>
    %21 = arith.addf %15, %20 : vector<8x128xf32>
    %c0_13 = arith.constant 0 : index
    %c0_14 = arith.constant 0 : index
    %22 = vector.load %arg11[%c0_13, %c0_14] : memref<8x128xf32, #tpu.memory_space<vmem>>, vector<8x128xf32>
    tpu.vector_store %arg11[%c0_13, %c0_14], %21 {strides = array<i32>} : memref<8x128xf32, #tpu.memory_space<vmem>>, vector<8x128xf32>,
    %c1_i32 = arith.constant 1 : i32
    %23 = arith.cmpi eq, %arg1, %c1_i32 : i32
    %24 = arith.extui %23 : i1 to i32
    %c0_i32_15 = arith.constant 0 : i32
    %25 = arith.cmpi ne, %24, %c0_i32_15 : i32
    scf.if %25 {
      %c0_16 = arith.constant 0 : index
      %c0_17 = arith.constant 0 : index
      %26 = vector.load %arg8[%c0_16, %c0_17] : memref<1x128xf32, #tpu.memory_space<vmem>>, vector<1x128xf32>
      %c0_18 = arith.constant 0 : index
      %c0_19 = arith.constant 0 : index
      %27 = vector.load %arg5[%c0_18, %c0_19] : memref<1x128xf32, #tpu.memory_space<vmem>>, vector<1x128xf32>
      %c0_20 = arith.constant 0 : index
      %c0_21 = arith.constant 0 : index
      %28 = vector.load %arg6[%c0_20, %c0_21] : memref<1x128xf32, #tpu.memory_space<vmem>>, vector<1x128xf32>
      %29 = arith.mulf %28, %26 : vector<1x128xf32>
      %30 = arith.addf %27, %29 : vector<1x128xf32>
      %c0_22 = arith.constant 0 : index
      %c0_23 = arith.constant 0 : index
      %31 = vector.load %arg10[%c0_22, %c0_23] : memref<8x128xf32, #tpu.memory_space<vmem>>, vector<8x128xf32>
      %c0_24 = arith.constant 0 : index
      %c0_25 = arith.constant 0 : index
      %32 = vector.load %arg11[%c0_24, %c0_25] : memref<8x128xf32, #tpu.memory_space<vmem>>, vector<8x128xf32>
      %33 = vector.broadcast %26 : vector<1x128xf32> to vector<8x128xf32>
      %34 = arith.mulf %33, %32 : vector<8x128xf32>
      %35 = arith.addf %31, %34 : vector<8x128xf32>
      %36 = vector.broadcast %30 : vector<1x128xf32> to vector<8x128xf32>
      %37 = arith.addf %35, %36 : vector<8x128xf32>
      %c0_26 = arith.constant 0 : index
      %c0_27 = arith.constant 0 : index
      %38 = vector.load %arg9[%c0_26, %c0_27] : memref<8x128xf32, #tpu.memory_space<vmem>>, vector<8x128xf32>
      tpu.vector_store %arg9[%c0_26, %c0_27], %37 {strides = array<i32>} : memref<8x128xf32, #tpu.memory_space<vmem>>, vector<8x128xf32>,
    } else {
    }
    return
  }
  func.func @transform_0(%arg0: i32, %arg1: i32) -> (i32, i32) {
    %c0_i32 = arith.constant 0 : i32
    %c0_i32_0 = arith.constant 0 : i32
    %c0_i32_1 = arith.constant 0 : i32
    return %c0_i32, %c0_i32_0 : i32, i32
  }
  func.func @transform_1(%arg0: i32, %arg1: i32) -> (i32, i32) {
    %c0_i32 = arith.constant 0 : i32
    return %arg1, %arg0 : i32, i32
  }
  func.func @transform_2(%arg0: i32, %arg1: i32) -> (i32, i32) {
    %c0_i32 = arith.constant 0 : i32
    return %arg1, %arg0 : i32, i32
  }
  func.func @transform_3(%arg0: i32, %arg1: i32) -> (i32, i32) {
    %c0_i32 = arith.constant 0 : i32
    %c0_i32_0 = arith.constant 0 : i32
    return %c0_i32, %arg0 : i32, i32
  }
  func.func @transform_4(%arg0: i32, %arg1: i32) -> (i32, i32) {
    %c0_i32 = arith.constant 0 : i32
    %c0_i32_0 = arith.constant 0 : i32
    return %c0_i32, %arg0 : i32, i32
  }
  func.func @transform_5(%arg0: i32, %arg1: i32) -> (i32, i32) {
    %c0_i32 = arith.constant 0 : i32
    %c0_i32_0 = arith.constant 0 : i32
    %c0_i32_1 = arith.constant 0 : i32
    return %c0_i32, %c0_i32_0 : i32, i32
  }
  func.func @transform_6(%arg0: i32, %arg1: i32) -> (i32, i32) {
    %c0_i32 = arith.constant 0 : i32
    %c0_i32_0 = arith.constant 0 : i32
    return %c0_i32, %arg0 : i32, i32
  }
  func.func @transform_7(%arg0: i32, %arg1: i32) -> (i32, i32) {
    %c0_i32 = arith.constant 0 : i32
    %c0_i32_0 = arith.constant 0 : i32
    return %c0_i32, %arg0 : i32, i32
  }
}

</mosaic_0001>

<llo_original>
// kernel: tpu_custom_call.1
$region0: #{tpu_custom_call.1}
  #allocation0 [shape = 'u32[]', space=smem, size = 0x4, offset = 0x4, fixed_abs, tag = 'smem constant byte address 0x4 - core index']
  #allocation1 [shape = 'u32[144,128]{1,0:T(1,128)}', space=vmem, size = 0x12000, scoped, tag = 'internal scratch']
  #allocation2 [shape = 'f32[8,128]{1,0:T(8,128)}', space=vmem, size = 0x1000, scoped, tag = 'scratch operand']
  #allocation3 [shape = 'f32[8,128]{1,0:T(8,128)}', space=vmem, size = 0x1000, scoped, tag = 'scratch operand']
  %s0 = inlined_call_operand.hbm [shape: f32[8,256], index: 0, kind: input, shape index: {}]
  %s1 = inlined_call_operand.hbm [shape: bf16[256,384], index: 1, kind: input, shape index: {}]
  %s2 = inlined_call_operand.hbm [shape: bf16[256,384], index: 2, kind: input, shape index: {}]
  %s3 = inlined_call_operand.vmem [shape: f32[1,384], index: 3, kind: input, shape index: {}]
  %s4 = inlined_call_operand.vmem [shape: f32[1,384], index: 4, kind: input, shape index: {}]
  %s5 = inlined_call_operand.hbm [shape: f32[1,256], index: 5, kind: input, shape index: {}]
  %s6 = inlined_call_operand.vmem [shape: f32[1,384], index: 6, kind: input, shape index: {}]
  %s7 = inlined_call_operand.hbm [shape: f32[8,384], index: 7, kind: output, shape index: {}]
  %s8 = sld [smem:[#allocation0]]
  $region85: #{tpu_custom_call.1} parent=0
    _
  %s10 = ssub.s32 1, %s8
  %s11 = scalar_select 0, %s10, %s8
  $region1: #{tpu_custom_call.1} parent=0
    #allocation4 [shape = 'u8[8192]{0}', space=vmem, size = 0x2000, scoped, tag = 'input window, operand 0, single buffered']
    #allocation5 [shape = 's32[2]{0}', space=sflag, size = 0x8, scoped, tag = 'scoped memory for tpu_custom_call.1']
    #allocation6 [shape = 's32[2]{0}', space=sflag, size = 0x8, scoped, tag = 'scoped memory for tpu_custom_call.1']
    #allocation7 [shape = 'u8[65536]{0}', space=vmem, size = 0x10000, scoped, tag = 'input window, operand 1']
    #allocation8 [shape = 's32[2]{0}', space=sflag, size = 0x8, scoped, tag = 'scoped memory for tpu_custom_call.1']
    #allocation9 [shape = 'u8[65536]{0}', space=vmem, size = 0x10000, scoped, tag = 'input window, operand 2']
    #allocation10 [shape = 'u8[1024]{0}', space=vmem, size = 0x400, scoped, tag = 'input window, operand 5, single buffered']
    #allocation11 [shape = 's32[1]{0}', space=sflag, size = 0x4, scoped, tag = 'scoped memory for tpu_custom_call.1']
    #allocation12 [shape = 'u8[8192]{0}', space=vmem, size = 0x2000, scoped, tag = 'output window, operand 0']
    %12 = vsyncpa [#allocation5], 0
    %13 = vsyncpa [#allocation8], 0
    %s14 = scalar_lea.sflag [#allocation8], 1
    %15 = vsyncpa %s14, 0
    %16 = vsyncpa [#allocation11], 0
    %17 = vsyncpa [#allocation6], 0
    %s18 = scalar_lea.sflag [#allocation6], 1
    %19 = vsyncpa %s18, 0
    loop: start=0, step=1, limit=8
    $region2: #{tpu_custom_call.1} parent=1 // loop_pre_header
      _
    $region3: #{tpu_custom_call.1} parent=1 // loop_header
      %s21 = sphi 0, %s25
      %p22 = scmp.ge.s32.totalorder %s21, 8
      %s28 = sphi 0, %s40
      %s29 = sphi 0, %s36
      %s30 = sphi 0, %s28
      %s31 = sphi 0, %s29
      %s32 = sphi 0, %s30
      %s33 = sphi 0, %s31
      %s41 = sphi 0, %s41
      %s43 = sphi 0, %s41
      %s44 = sphi 0, %s43
      %s58 = sphi 0, %s44
      %s66 = sphi 0, %s68
      %s69 = sphi 0, %s66
      %s70 = sphi 0, %s69
      %s86 = sphi 0, %s70
      %s94 = sphi 0, %s96
      %s97 = sphi 0, %s94
      %s98 = sphi 0, %s97
      %s114 = sphi 0, %s98
      %s120 = sphi 0, %s122
      %s123 = sphi 0, %s120
      %s124 = sphi 0, %s123
      %s140 = sphi 0, %s124
      %s146 = sphi 0, %s148
      %s149 = sphi 0, %s146
      %s150 = sphi 0, %s149
      %s166 = sphi 0, %s150
      %s170 = sphi 0, %s170
      %s172 = sphi 0, %s170
      %s173 = sphi 0, %s172
      %s187 = sphi 0, %s173
      %s193 = sphi 0, %s195
      %s196 = sphi 0, %s193
      %s197 = sphi 0, %s196
      %s213 = sphi 0, %s197
      %s219 = sphi 0, %s221
      %s222 = sphi 0, %s219
      %s223 = sphi 0, %s222
      %s239 = sphi 0, %s223
    $region4: #{tpu_custom_call.1} parent=1 // loop_header_branch
      %24 = sbr.rel (%p22) target = $region8
    $region5: #{tpu_custom_call.1} parent=1 // loop_body
      %s26 = ssub.s32 %s21, 1
      %s27 = ssub.s32 %s21, 2
      %s34 = sadd.s32 1, %s29
      %p35 = scmp.ge.s32.totalorder %s34, 2
      %s36 = scalar_select %p35, 0, %s34
      %s37 = sadd.s32 1, %s28
      %s38 = scalar_select %p35, %s37, %s28
      %p39 = scmp.ge.s32.totalorder %s38, 3
      %s40 = scalar_select %p39, 0, %s38
      %s42 = sadd.s32 %s41, 1
      %p45 = scmp.eq.s32.totalorder %s21, 5
      %p46 = scmp.ne.s32.totalorder %s41, %s43
      %p47 = scmp.eq.s32.totalorder %s21, 0
      %p48 = por %p46, %p47
      %p49 = scmp.ne.s32.totalorder %s41, %s43
      %p50 = scmp.eq.s32.totalorder %s26, 5
      %p51 = por %p49, %p50
      %p52 = scmp.ne.s32.totalorder %s43, %s44
      %p53 = scmp.eq.s32.totalorder %s26, 0
      %p54 = por %p52, %p53
      %p55 = scmp.ne.s32.totalorder %s43, %s44
      %p56 = scmp.eq.s32.totalorder %s27, 5
      %p57 = por %p55, %p56
      %p59 = scmp.ne.s32.totalorder %s44, %s58
      %p60 = scmp.eq.s32.totalorder %s27, 0
      %p61 = por %p59, %p60
      %s62 = ssub.s32 %s29, %s36
      %s63 = ssub.s32 %s28, %s40
      %s64 = sor.u32 %s62, %s63
      %p65 = scmp.eq.s32.totalorder %s64, 0
      %s67 = sadd.s32 %s66, 1
      %s68 = scalar_select %p65, %s66, %s67
      %p71 = pneg %p65
      %p72 = scmp.eq.s32.totalorder %s21, 5
      %p73 = por %p71, %p72
      %p74 = scmp.ne.s32.totalorder %s66, %s69
      %p75 = scmp.eq.s32.totalorder %s21, 0
      %p76 = por %p74, %p75
      %p77 = scmp.ne.s32.totalorder %s66, %s69
      %p78 = scmp.eq.s32.totalorder %s26, 5
      %p79 = por %p77, %p78
      %p80 = scmp.ne.s32.totalorder %s69, %s70
      %p81 = scmp.eq.s32.totalorder %s26, 0
      %p82 = por %p80, %p81
      %p83 = scmp.ne.s32.totalorder %s69, %s70
      %p84 = scmp.eq.s32.totalorder %s27, 5
      %p85 = por %p83, %p84
      %p87 = scmp.ne.s32.totalorder %s70, %s86
      %p88 = scmp.eq.s32.totalorder %s27, 0
      %p89 = por %p87, %p88
      %s90 = ssub.s32 %s29, %s36
      %s91 = ssub.s32 %s28, %s40
      %s92 = sor.u32 %s90, %s91
      %p93 = scmp.eq.s32.totalorder %s92, 0
      %s95 = sadd.s32 %s94, 1
      %s96 = scalar_select %p93, %s94, %s95
      %p99 = pneg %p93
      %p100 = scmp.eq.s32.totalorder %s21, 5
      %p101 = por %p99, %p100
      %p102 = scmp.ne.s32.totalorder %s94, %s97
      %p103 = scmp.eq.s32.totalorder %s21, 0
      %p104 = por %p102, %p103
      %p105 = scmp.ne.s32.totalorder %s94, %s97
      %p106 = scmp.eq.s32.totalorder %s26, 5
      %p107 = por %p105, %p106
      %p108 = scmp.ne.s32.totalorder %s97, %s98
      %p109 = scmp.eq.s32.totalorder %s26, 0
      %p110 = por %p108, %p109
      %p111 = scmp.ne.s32.totalorder %s97, %s98
      %p112 = scmp.eq.s32.totalorder %s27, 5
      %p113 = por %p111, %p112
      %p115 = scmp.ne.s32.totalorder %s98, %s114
      %p116 = scmp.eq.s32.totalorder %s27, 0
      %p117 = por %p115, %p116
      %s118 = ssub.s32 %s28, %s40
      %p119 = scmp.eq.s32.totalorder %s118, 0
      %s121 = sadd.s32 %s120, 1
      %s122 = scalar_select %p119, %s120, %s121
      %p125 = pneg %p119
      %p126 = scmp.eq.s32.totalorder %s21, 5
      %p127 = por %p125, %p126
      %p128 = scmp.ne.s32.totalorder %s120, %s123
      %p129 = scmp.eq.s32.totalorder %s21, 0
      %p130 = por %p128, %p129
      %p131 = scmp.ne.s32.totalorder %s120, %s123
      %p132 = scmp.eq.s32.totalorder %s26, 5
      %p133 = por %p131, %p132
      %p134 = scmp.ne.s32.totalorder %s123, %s124
      %p135 = scmp.eq.s32.totalorder %s26, 0
      %p136 = por %p134, %p135
      %p137 = scmp.ne.s32.totalorder %s123, %s124
      %p138 = scmp.eq.s32.totalorder %s27, 5
      %p139 = por %p137, %p138
      %p141 = scmp.ne.s32.totalorder %s124, %s140
      %p142 = scmp.eq.s32.totalorder %s27, 0
      %p143 = por %p141, %p142
      %s144 = ssub.s32 %s28, %s40
      %p145 = scmp.eq.s32.totalorder %s144, 0
      %s147 = sadd.s32 %s146, 1
      %s148 = scalar_select %p145, %s146, %s147
      %p151 = pneg %p145
      %p152 = scmp.eq.s32.totalorder %s21, 5
      %p153 = por %p151, %p152
      %p154 = scmp.ne.s32.totalorder %s146, %s149
      %p155 = scmp.eq.s32.totalorder %s21, 0
      %p156 = por %p154, %p155
      %p157 = scmp.ne.s32.totalorder %s146, %s149
      %p158 = scmp.eq.s32.totalorder %s26, 5
      %p159 = por %p157, %p158
      %p160 = scmp.ne.s32.totalorder %s149, %s150
      %p161 = scmp.eq.s32.totalorder %s26, 0
      %p162 = por %p160, %p161
      %p163 = scmp.ne.s32.totalorder %s149, %s150
      %p164 = scmp.eq.s32.totalorder %s27, 5
      %p165 = por %p163, %p164
      %p167 = scmp.ne.s32.totalorder %s150, %s166
      %p168 = scmp.eq.s32.totalorder %s27, 0
      %p169 = por %p167, %p168
      %s171 = sadd.s32 %s170, 1
      %p174 = scmp.eq.s32.totalorder %s21, 5
      %p175 = scmp.ne.s32.totalorder %s170, %s172
      %p176 = scmp.eq.s32.totalorder %s21, 0
      %p177 = por %p175, %p176
      %p178 = scmp.ne.s32.totalorder %s170, %s172
      %p179 = scmp.eq.s32.totalorder %s26, 5
      %p180 = por %p178, %p179
      %p181 = scmp.ne.s32.totalorder %s172, %s173
      %p182 = scmp.eq.s32.totalorder %s26, 0
      %p183 = por %p181, %p182
      %p184 = scmp.ne.s32.totalorder %s172, %s173
      %p185 = scmp.eq.s32.totalorder %s27, 5
      %p186 = por %p184, %p185
      %p188 = scmp.ne.s32.totalorder %s173, %s187
      %p189 = scmp.eq.s32.totalorder %s27, 0
      %p190 = por %p188, %p189
      %s191 = ssub.s32 %s28, %s40
      %p192 = scmp.eq.s32.totalorder %s191, 0
      %s194 = sadd.s32 %s193, 1
      %s195 = scalar_select %p192, %s193, %s194
      %p198 = pneg %p192
      %p199 = scmp.eq.s32.totalorder %s21, 5
      %p200 = por %p198, %p199
      %p201 = scmp.ne.s32.totalorder %s193, %s196
      %p202 = scmp.eq.s32.totalorder %s21, 0
      %p203 = por %p201, %p202
      %p204 = scmp.ne.s32.totalorder %s193, %s196
      %p205 = scmp.eq.s32.totalorder %s26, 5
      %p206 = por %p204, %p205
      %p207 = scmp.ne.s32.totalorder %s196, %s197
      %p208 = scmp.eq.s32.totalorder %s26, 0
      %p209 = por %p207, %p208
      %p210 = scmp.ne.s32.totalorder %s196, %s197
      %p211 = scmp.eq.s32.totalorder %s27, 5
      %p212 = por %p210, %p211
      %p214 = scmp.ne.s32.totalorder %s197, %s213
      %p215 = scmp.eq.s32.totalorder %s27, 0
      %p216 = por %p214, %p215
      %s217 = ssub.s32 %s28, %s40
      %p218 = scmp.eq.s32.totalorder %s217, 0
      %s220 = sadd.s32 %s219, 1
      %s221 = scalar_select %p218, %s219, %s220
      %p224 = pneg %p218
      %p225 = scmp.eq.s32.totalorder %s21, 5
      %p226 = por %p224, %p225
      %p227 = scmp.ne.s32.totalorder %s219, %s222
      %p228 = scmp.eq.s32.totalorder %s21, 0
      %p229 = por %p227, %p228
      %p230 = scmp.ne.s32.totalorder %s219, %s222
      %p231 = scmp.eq.s32.totalorder %s26, 5
      %p232 = por %p230, %p231
      %p233 = scmp.ne.s32.totalorder %s222, %s223
      %p234 = scmp.eq.s32.totalorder %s26, 0
      %p235 = por %p233, %p234
      %p236 = scmp.ne.s32.totalorder %s222, %s223
      %p237 = scmp.eq.s32.totalorder %s27, 5
      %p238 = por %p236, %p237
      %p240 = scmp.ne.s32.totalorder %s223, %s239
      %p241 = scmp.eq.s32.totalorder %s27, 0
      %p242 = por %p240, %p241
      %p243 = scmp.le.s32.totalorder 1, %s21
      %p244 = scmp.lt.s32.totalorder %s21, 7
      %p245 = pnand %p243, %p244
      %p246 = pneg %p245
      // Predicated region
      $region9: #{tpu_custom_call.1} parent=5 // pred_check
        _
      $region10: #{tpu_custom_call.1} parent=5 // pred_check_branch
        %248 = sbr.rel (%p245) target = $region12
      $region11: #{tpu_custom_call.1} parent=5 // pred_region
        %s249 = ssub.s32 %s21, 1
        // Predicated region
        $region13: #{tpu_custom_call.1} parent=11 // pred_check
          %p250 = pneg %p54
        $region14: #{tpu_custom_call.1} parent=11 // pred_check_branch
          %252 = sbr.rel (%p250) target = $region16
        $region15: #{tpu_custom_call.1} parent=11 // pred_region
          %s254 = ssub.s32 256, 256
          %255 = vsyncadd [#allocation5], %s254
          %s257 = sshll.u32 [#allocation4], 4
          %s258 = int_to_ptr.vmem [resolvable:$true] %s257
          %260 = dma.hbm_to_vmem [thread:$0]  %s0, 256, %s258, [#allocation5]
        $region16: #{tpu_custom_call.1} parent=11 // pred_fallthru
          _
        // Predicated region
        $region17: #{tpu_custom_call.1} parent=11 // pred_check
          %p261 = pneg %p183
        $region18: #{tpu_custom_call.1} parent=11 // pred_check_branch
          %263 = sbr.rel (%p261) target = $region20
        $region19: #{tpu_custom_call.1} parent=11 // pred_region
          %s265 = ssub.s32 32, 32
          %266 = vsyncadd [#allocation11], %s265
          %s268 = sshll.u32 [#allocation10], 4
          %s269 = int_to_ptr.vmem [resolvable:$true] %s268
          %271 = dma.hbm_to_vmem [thread:$0]  %s5, 32, %s269, [#allocation11]
        $region20: #{tpu_custom_call.1} parent=11 // pred_fallthru
          _
      $region12: #{tpu_custom_call.1} parent=5 // pred_fallthru
        _
      %p272 = scmp.lt.s32.totalorder %s21, 6
      // Predicated region
      $region21: #{tpu_custom_call.1} parent=5 // pred_check
        %p273 = pneg %p272
      $region22: #{tpu_custom_call.1} parent=5 // pred_check_branch
        %275 = sbr.rel (%p273) target = $region24
      $region23: #{tpu_custom_call.1} parent=5 // pred_region
        // Predicated region
        $region25: #{tpu_custom_call.1} parent=23 // pred_check
          %p276 = pneg %p76
        $region26: #{tpu_custom_call.1} parent=23 // pred_check_branch
          %278 = sbr.rel (%p276) target = $region28
        $region27: #{tpu_custom_call.1} parent=23 // pred_region
          %s279 = sand.u32 %s21, 1
          %s280 = scalar_lea.sflag [#allocation8], %s279
          %s281 = sand.u32 %s66, 1
          %s282 = smul.addr %s281, 64
          %s283 = scalar_lea.vmem [#allocation7], %s282
          %s284 = smul.u32 16, %s29
          %s286 = ssub.s32 1024, 1024
          %287 = vsyncadd %s280, %s286
          %s288 = smul.addr %s284, 3
          %s289 = sadd.s32 %s28, %s288
          %s290 = smul.addr %s289, 64
          %s291 = scalar_lea.hbm %s1, %s290
          %s292 = sshll.u32 %s283, 4
          %s293 = int_to_ptr.vmem [resolvable:$true] %s292
          %298 = dma.hbm_to_vmem [thread:$0]  %s291, 1024, %s293, %s280, 192, 64, 4
        $region28: #{tpu_custom_call.1} parent=23 // pred_fallthru
          _
        // Predicated region
        $region29: #{tpu_custom_call.1} parent=23 // pred_check
          %p299 = pneg %p104
        $region30: #{tpu_custom_call.1} parent=23 // pred_check_branch
          %301 = sbr.rel (%p299) target = $region32
        $region31: #{tpu_custom_call.1} parent=23 // pred_region
          %s302 = sand.u32 %s21, 1
          %s303 = scalar_lea.sflag [#allocation8], %s302
          %s304 = sand.u32 %s94, 1
          %s305 = smul.addr %s304, 64
          %s306 = scalar_lea.vmem [#allocation9], %s305
          %s307 = smul.u32 16, %s29
          %s309 = ssub.s32 1024, 1024
          %310 = vsyncadd %s303, %s309
          %s311 = smul.addr %s307, 3
          %s312 = sadd.s32 %s28, %s311
          %s313 = smul.addr %s312, 64
          %s314 = scalar_lea.hbm %s2, %s313
          %s315 = sshll.u32 %s306, 4
          %s316 = int_to_ptr.vmem [resolvable:$true] %s315
          %321 = dma.hbm_to_vmem [thread:$0]  %s314, 1024, %s316, %s303, 192, 64, 4
        $region32: #{tpu_custom_call.1} parent=23 // pred_fallthru
          _
        // Predicated region
        $region33: #{tpu_custom_call.1} parent=23 // pred_check
          %p322 = pneg %p130
        $region34: #{tpu_custom_call.1} parent=23 // pred_check_branch
          %324 = sbr.rel (%p322) target = $region36
        $region35: #{tpu_custom_call.1} parent=23 // pred_region
          %p325 = scmp.lt.s32.totalorder %s28, 2
          %s326 = scalar_select %p325, %s28, 2
          %s327 = scalar_lea.vmem %s3, %s326
        $region36: #{tpu_custom_call.1} parent=23 // pred_fallthru
          _
        // Predicated region
        $region37: #{tpu_custom_call.1} parent=23 // pred_check
          %p328 = pneg %p156
        $region38: #{tpu_custom_call.1} parent=23 // pred_check_branch
          %330 = sbr.rel (%p328) target = $region40
        $region39: #{tpu_custom_call.1} parent=23 // pred_region
          %p331 = scmp.lt.s32.totalorder %s28, 2
          %s332 = scalar_select %p331, %s28, 2
          %s333 = scalar_lea.vmem %s4, %s332
        $region40: #{tpu_custom_call.1} parent=23 // pred_fallthru
          _
        // Predicated region
        $region41: #{tpu_custom_call.1} parent=23 // pred_check
          %p334 = pneg %p203
        $region42: #{tpu_custom_call.1} parent=23 // pred_check_branch
          %336 = sbr.rel (%p334) target = $region44
        $region43: #{tpu_custom_call.1} parent=23 // pred_region
          %p337 = scmp.lt.s32.totalorder %s28, 2
          %s338 = scalar_select %p337, %s28, 2
          %s339 = scalar_lea.vmem %s6, %s338
        $region44: #{tpu_custom_call.1} parent=23 // pred_fallthru
          _
      $region24: #{tpu_custom_call.1} parent=5 // pred_fallthru
        _
      %p340 = scmp.le.s32.totalorder 1, %s21
      %p341 = scmp.lt.s32.totalorder %s21, 7
      %p342 = pnand %p340, %p341
      %p343 = pneg %p342
      // Predicated region
      $region45: #{tpu_custom_call.1} parent=5 // pred_check
        _
      $region46: #{tpu_custom_call.1} parent=5 // pred_check_branch
        %345 = sbr.rel (%p342) target = $region48
      $region47: #{tpu_custom_call.1} parent=5 // pred_region
        %s346 = ssub.s32 %s21, 1
        // Predicated region
        $region49: #{tpu_custom_call.1} parent=47 // pred_check
          %p347 = pneg %p54
        $region50: #{tpu_custom_call.1} parent=47 // pred_check_branch
          %349 = sbr.rel (%p347) target = $region52
        $region51: #{tpu_custom_call.1} parent=47 // pred_region
          %350 = dma.done [#allocation5], 256
        $region52: #{tpu_custom_call.1} parent=47 // pred_fallthru
          _
        %s351 = sand.u32 %s26, 1
        %s352 = scalar_lea.sflag [#allocation8], %s351
        %s353 = sand.u32 %s69, 1
        %s354 = smul.addr %s353, 64
        %s355 = scalar_lea.vmem [#allocation7], %s354
        // Predicated region
        $region53: #{tpu_custom_call.1} parent=47 // pred_check
          %p356 = pneg %p82
        $region54: #{tpu_custom_call.1} parent=47 // pred_check_branch
          %358 = sbr.rel (%p356) target = $region56
        $region55: #{tpu_custom_call.1} parent=47 // pred_region
          %359 = dma.done %s352, 1024
        $region56: #{tpu_custom_call.1} parent=47 // pred_fallthru
          _
        %s360 = sand.u32 %s26, 1
        %s361 = scalar_lea.sflag [#allocation8], %s360
        %s362 = sand.u32 %s97, 1
        %s363 = smul.addr %s362, 64
        %s364 = scalar_lea.vmem [#allocation9], %s363
        // Predicated region
        $region57: #{tpu_custom_call.1} parent=47 // pred_check
          %p365 = pneg %p110
        $region58: #{tpu_custom_call.1} parent=47 // pred_check_branch
          %367 = sbr.rel (%p365) target = $region60
        $region59: #{tpu_custom_call.1} parent=47 // pred_region
          %368 = dma.done %s361, 1024
        $region60: #{tpu_custom_call.1} parent=47 // pred_fallthru
          _
        // Predicated region
        $region61: #{tpu_custom_call.1} parent=47 // pred_check
          %p369 = pneg %p183
        $region62: #{tpu_custom_call.1} parent=47 // pred_check_branch
          %371 = sbr.rel (%p369) target = $region64
        $region63: #{tpu_custom_call.1} parent=47 // pred_region
          %372 = dma.done [#allocation11], 32
        $region64: #{tpu_custom_call.1} parent=47 // pred_fallthru
          _
        %p373 = pneg %p54
        %p374 = pneg %p51
        %s375 = sand.u32 %s26, 1
        %s376 = scalar_lea.sflag [#allocation8], %s375
        %s377 = sand.u32 %s69, 1
        %s378 = smul.addr %s377, 64
        %s379 = scalar_lea.vmem [#allocation7], %s378
        %p380 = pneg %p82
        %p381 = pneg %p79
        %s382 = sand.u32 %s26, 1
        %s383 = scalar_lea.sflag [#allocation8], %s382
        %s384 = sand.u32 %s97, 1
        %s385 = smul.addr %s384, 64
        %s386 = scalar_lea.vmem [#allocation9], %s385
        %p387 = pneg %p110
        %p388 = pneg %p107
        %p389 = scmp.lt.s32.totalorder %s30, 2
        %s390 = scalar_select %p389, %s30, 2
        %s391 = scalar_lea.vmem %s3, %s390
        %p392 = pneg %p136
        %p393 = pneg %p133
        %p394 = scmp.lt.s32.totalorder %s30, 2
        %s395 = scalar_select %p394, %s30, 2
        %s396 = scalar_lea.vmem %s4, %s395
        %p397 = pneg %p162
        %p398 = pneg %p159
        %p399 = pneg %p183
        %p400 = pneg %p180
        %p401 = scmp.lt.s32.totalorder %s30, 2
        %s402 = scalar_select %p401, %s30, 2
        %s403 = scalar_lea.vmem %s6, %s402
        %p404 = pneg %p209
        %p405 = pneg %p206
        %p406 = pneg %p235
        %p407 = pneg %p232
        %s408 = sand.u32 %s222, 1
        %s409 = scalar_lea.sflag [#allocation6], %s408
        %s410 = sand.u32 %s222, 1
        %s411 = smul.addr %s410, 8
        %s412 = scalar_lea.vmem [#allocation12], %s411
        %s413 = smul.u32 16, %s31
        %s414 = smul.u32 16, %s31
        %p415 = scmp.lt.s32.totalorder %s30, 2
        %s416 = scalar_select %p415, %s30, 2
        %s417 = scalar_lea.vmem %s3, %s416
        %p418 = scmp.lt.s32.totalorder %s30, 2
        %s419 = scalar_select %p418, %s30, 2
        %s420 = scalar_lea.vmem %s4, %s419
        %p421 = scmp.lt.s32.totalorder %s30, 2
        %s422 = scalar_select %p421, %s30, 2
        %s423 = scalar_lea.vmem %s6, %s422
        %p425 = scmp.eq.s32.totalorder %s31, 0
        // Predicated region
        $region65: #{tpu_custom_call.1} parent=47 // pred_check
          %p426 = pneg %p425
        $region66: #{tpu_custom_call.1} parent=47 // pred_check_branch
          %428 = sbr.rel (%p426) target = $region68
        $region67: #{tpu_custom_call.1} parent=47 // pred_region
          %429 = vst [vmem:[#allocation2] sm:$0xff] 0.0
          %430 = vst [vmem:[#allocation3] sm:$0xff] 0.0
        $region68: #{tpu_custom_call.1} parent=47 // pred_fallthru
          _
        %s431 = smul.u32 %s31, 128
        %s432 = sshra.s32 %s431, 7
        %s433 = sand.u32 %s431, 127
        %s434 = smul.addr %s432, 8
        %s435 = scalar_lea.vmem [#allocation4], %s434
        %v436 = vld [vmem:[%s435] sm:$0xff]
        %s437 = scalar_lea.vmem [#allocation10], %s432
        %v438 = vld [vmem:[%s437] sm:$0x1]
        %v439 = vld [vmem:[#allocation2] sm:$0xff]
        %v440 = vpack.c.bf16 %v436, %v436
        %v441 = vld [vmem:[%s355] sm:$0xf]
        %v442 = vld [vmem:[%s355 + $0x4] sm:$0xf]
        %v443 = vld [vmem:[%s355 + $0x8] sm:$0xf]
        %v444 = vld [vmem:[%s355 + $0xc] sm:$0xf]
        %v445 = vld [vmem:[%s355 + $0x10] sm:$0xf]
        %v446 = vld [vmem:[%s355 + $0x14] sm:$0xf]
        %v447 = vld [vmem:[%s355 + $0x18] sm:$0xf]
        %v448 = vld [vmem:[%s355 + $0x1c] sm:$0xf]
        %v449 = vld [vmem:[%s355 + $0x20] sm:$0xf]
        %v450 = vld [vmem:[%s355 + $0x24] sm:$0xf]
        %v451 = vld [vmem:[%s355 + $0x28] sm:$0xf]
        %v452 = vld [vmem:[%s355 + $0x2c] sm:$0xf]
        %v453 = vld [vmem:[%s355 + $0x30] sm:$0xf]
        %v454 = vld [vmem:[%s355 + $0x34] sm:$0xf]
        %v455 = vld [vmem:[%s355 + $0x38] sm:$0xf]
        %v456 = vld [vmem:[%s355 + $0x3c] sm:$0xf]
        %v473 = vunpack.c.l.b16 %v441
        %v474 = vunpack.c.l.b16 %v442
        %v475 = vunpack.c.l.b16 %v443
        %v476 = vunpack.c.l.b16 %v444
        %v477 = vunpack.c.l.b16 %v445
        %v478 = vunpack.c.l.b16 %v446
        %v479 = vunpack.c.l.b16 %v447
        %v480 = vunpack.c.l.b16 %v448
        %v481 = vunpack.c.l.b16 %v449
        %v482 = vunpack.c.l.b16 %v450
        %v483 = vunpack.c.l.b16 %v451
        %v484 = vunpack.c.l.b16 %v452
        %v485 = vunpack.c.l.b16 %v453
        %v486 = vunpack.c.l.b16 %v454
        %v487 = vunpack.c.l.b16 %v455
        %v488 = vunpack.c.l.b16 %v456
        %v489 = vpack.c.b16 %v474, %v473
        %v490 = vpack.c.b16 %v476, %v475
        %v491 = vpack.c.b16 %v478, %v477
        %v492 = vpack.c.b16 %v480, %v479
        %v493 = vpack.c.b16 %v482, %v481
        %v494 = vpack.c.b16 %v484, %v483
        %v495 = vpack.c.b16 %v486, %v485
        %v496 = vpack.c.b16 %v488, %v487
        %505 = vmatprep.subr.bf16.mxu0 0
        %506 = vmatpush1.bf16.msra.mxu0 %v496
        %507 = vmatprep.subr.bf16.mxu0 0
        %508 = vmatpush1.bf16.msra.mxu0 %v495
        %509 = vmatprep.subr.bf16.mxu0 0
        %510 = vmatpush1.bf16.msra.mxu0 %v494
        %511 = vmatprep.subr.bf16.mxu0 0
        %512 = vmatpush1.bf16.msra.mxu0 %v493
        %513 = vmatprep.subr.bf16.mxu0 0
        %514 = vmatpush1.bf16.msra.mxu0 %v492
        %515 = vmatprep.subr.bf16.mxu0 0
        %516 = vmatpush1.bf16.msra.mxu0 %v491
        %517 = vmatprep.subr.bf16.mxu0 0
        %518 = vmatpush1.bf16.msra.mxu0 %v490
        %519 = vmatprep.subr.bf16.mxu0 0
        %520 = vmatpush1.bf16.msra.mxu0 %v489
        %521 = vmatprep.subr.bf16.mxu0 0
        %522 = vmatpush2.bf16.msra.mxu0 0
        %523 = vmatprep.subr.bf16.mxu0 0
        %524 = vmatpush2.bf16.msra.mxu0 0
        %525 = vmatprep.subr.bf16.mxu0 0
        %526 = vmatpush2.bf16.msra.mxu0 0
        %527 = vmatprep.subr.bf16.mxu0 0
        %528 = vmatpush2.bf16.msra.mxu0 0
        %529 = vmatprep.subr.bf16.mxu0 0
        %530 = vmatpush2.bf16.msra.mxu0 0
        %531 = vmatprep.subr.bf16.mxu0 0
        %532 = vmatpush2.bf16.msra.mxu0 0
        %533 = vmatprep.subr.bf16.mxu0 0
        %534 = vmatpush2.bf16.msra.mxu0 0
        %535 = vmatprep.subr.bf16.mxu0 0
        %536 = vmatpush2.bf16.msra.mxu0 0
        %537 = vmatprep.mubr.bf16.mxu0 0
        %538 = vmatmul.mubr.bf16.gmra.mxu0 %v440
        %v539 = vpop.f32.mrf.mxu0
        %v540 = vadd.f32 0.0, %v539
        %v541 = vpop.f32.mrf.mxu0
        %v542 = vpop.f32.mrf.mxu0
        %v543 = vpop.f32.mrf.mxu0
        %544 = vdwg.mxu0
        %v545 = vadd.f32 %v439, %v540
        %546 = vst [vmem:[#allocation2] sm:$0xff] %v545
        %v547 = vld [vmem:[#allocation3] sm:$0xff]
        %v549 = vlaneseq
        %v550 = vshrl.u32 %v549, 7
        %v551 = vsub.s32 0, %v550
        %v552 = vrot.slane %v438, %v551
        %v554 = vmul.f32 %v436, %v552
        %v555 = vpack.c.bf16 %v554, %v554
        %v556 = vld [vmem:[%s364] sm:$0xf]
        %v557 = vld [vmem:[%s364 + $0x4] sm:$0xf]
        %v558 = vld [vmem:[%s364 + $0x8] sm:$0xf]
        %v559 = vld [vmem:[%s364 + $0xc] sm:$0xf]
        %v560 = vld [vmem:[%s364 + $0x10] sm:$0xf]
        %v561 = vld [vmem:[%s364 + $0x14] sm:$0xf]
        %v562 = vld [vmem:[%s364 + $0x18] sm:$0xf]
        %v563 = vld [vmem:[%s364 + $0x1c] sm:$0xf]
        %v564 = vld [vmem:[%s364 + $0x20] sm:$0xf]
        %v565 = vld [vmem:[%s364 + $0x24] sm:$0xf]
        %v566 = vld [vmem:[%s364 + $0x28] sm:$0xf]
        %v567 = vld [vmem:[%s364 + $0x2c] sm:$0xf]
        %v568 = vld [vmem:[%s364 + $0x30] sm:$0xf]
        %v569 = vld [vmem:[%s364 + $0x34] sm:$0xf]
        %v570 = vld [vmem:[%s364 + $0x38] sm:$0xf]
        %v571 = vld [vmem:[%s364 + $0x3c] sm:$0xf]
        %v588 = vunpack.c.l.b16 %v556
        %v589 = vunpack.c.l.b16 %v557
        %v590 = vunpack.c.l.b16 %v558
        %v591 = vunpack.c.l.b16 %v559
        %v592 = vunpack.c.l.b16 %v560
        %v593 = vunpack.c.l.b16 %v561
        %v594 = vunpack.c.l.b16 %v562
        %v595 = vunpack.c.l.b16 %v563
        %v596 = vunpack.c.l.b16 %v564
        %v597 = vunpack.c.l.b16 %v565
        %v598 = vunpack.c.l.b16 %v566
        %v599 = vunpack.c.l.b16 %v567
        %v600 = vunpack.c.l.b16 %v568
        %v601 = vunpack.c.l.b16 %v569
        %v602 = vunpack.c.l.b16 %v570
        %v603 = vunpack.c.l.b16 %v571
        %v604 = vpack.c.b16 %v589, %v588
        %v605 = vpack.c.b16 %v591, %v590
        %v606 = vpack.c.b16 %v593, %v592
        %v607 = vpack.c.b16 %v595, %v594
        %v608 = vpack.c.b16 %v597, %v596
        %v609 = vpack.c.b16 %v599, %v598
        %v610 = vpack.c.b16 %v601, %v600
        %v611 = vpack.c.b16 %v603, %v602
        %620 = vmatprep.subr.bf16.mxu0 0
        %621 = vmatpush1.bf16.msra.mxu0 %v611
        %622 = vmatprep.subr.bf16.mxu0 0
        %623 = vmatpush1.bf16.msra.mxu0 %v610
        %624 = vmatprep.subr.bf16.mxu0 0
        %625 = vmatpush1.bf16.msra.mxu0 %v609
        %626 = vmatprep.subr.bf16.mxu0 0
        %627 = vmatpush1.bf16.msra.mxu0 %v608
        %628 = vmatprep.subr.bf16.mxu0 0
        %629 = vmatpush1.bf16.msra.mxu0 %v607
        %630 = vmatprep.subr.bf16.mxu0 0
        %631 = vmatpush1.bf16.msra.mxu0 %v606
        %632 = vmatprep.subr.bf16.mxu0 0
        %633 = vmatpush1.bf16.msra.mxu0 %v605
        %634 = vmatprep.subr.bf16.mxu0 0
        %635 = vmatpush1.bf16.msra.mxu0 %v604
        %636 = vmatprep.subr.bf16.mxu0 0
        %637 = vmatpush2.bf16.msra.mxu0 0
        %638 = vmatprep.subr.bf16.mxu0 0
        %639 = vmatpush2.bf16.msra.mxu0 0
        %640 = vmatprep.subr.bf16.mxu0 0
        %641 = vmatpush2.bf16.msra.mxu0 0
        %642 = vmatprep.subr.bf16.mxu0 0
        %643 = vmatpush2.bf16.msra.mxu0 0
        %644 = vmatprep.subr.bf16.mxu0 0
        %645 = vmatpush2.bf16.msra.mxu0 0
        %646 = vmatprep.subr.bf16.mxu0 0
        %647 = vmatpush2.bf16.msra.mxu0 0
        %648 = vmatprep.subr.bf16.mxu0 0
        %649 = vmatpush2.bf16.msra.mxu0 0
        %650 = vmatprep.subr.bf16.mxu0 0
        %651 = vmatpush2.bf16.msra.mxu0 0
        %652 = vmatprep.mubr.bf16.mxu0 0
        %653 = vmatmul.mubr.bf16.gmra.mxu0 %v555
        %v654 = vpop.f32.mrf.mxu0
        %v655 = vadd.f32 0.0, %v654
        %v656 = vpop.f32.mrf.mxu0
        %v657 = vpop.f32.mrf.mxu0
        %v658 = vpop.f32.mrf.mxu0
        %659 = vdwg.mxu0
        %v660 = vadd.f32 %v547, %v655
        %661 = vst [vmem:[#allocation3] sm:$0xff] %v660
        %p662 = scmp.eq.s32.totalorder %s31, 1
        // Predicated region
        $region69: #{tpu_custom_call.1} parent=47 // pred_check
          %p663 = pneg %p662
        $region70: #{tpu_custom_call.1} parent=47 // pred_check_branch
          %665 = sbr.rel (%p663) target = $region72
        $region71: #{tpu_custom_call.1} parent=47 // pred_region
          %v666 = vld [vmem:[%s423] sm:$0x1]
          %v667 = vld [vmem:[%s417] sm:$0x1]
          %v668 = vld [vmem:[%s420] sm:$0x1]
          %v669 = vmul.f32 %v668, %v666
          %v670 = vadd.f32 %v667, %v669
          %v671 = vld [vmem:[#allocation2] sm:$0xff]
          %v672 = vld [vmem:[#allocation3] sm:$0xff]
          %v674 = vlaneseq
          %v675 = vshrl.u32 %v674, 7
          %v676 = vsub.s32 0, %v675
          %v677 = vrot.slane %v666, %v676
          %v679 = vmul.f32 %v677, %v672
          %v680 = vadd.f32 %v671, %v679
          %v682 = vlaneseq
          %v683 = vshrl.u32 %v682, 7
          %v684 = vsub.s32 0, %v683
          %v685 = vrot.slane %v670, %v684
          %v687 = vadd.f32 %v680, %v685
          %688 = vst [vmem:[%s412] sm:$0xff] %v687
        $region72: #{tpu_custom_call.1} parent=47 // pred_fallthru
          _
        %s689 = sand.u32 %s222, 1
        %s690 = scalar_lea.sflag [#allocation6], %s689
        %s691 = sand.u32 %s222, 1
        %s692 = smul.addr %s691, 8
        %s693 = scalar_lea.vmem [#allocation12], %s692
        // Predicated region
        $region73: #{tpu_custom_call.1} parent=47 // pred_check
          %p694 = pneg %p232
        $region74: #{tpu_custom_call.1} parent=47 // pred_check_branch
          %696 = sbr.rel (%p694) target = $region76
        $region75: #{tpu_custom_call.1} parent=47 // pred_region
          %s698 = ssub.s32 128, 128
          %699 = vsyncadd %s690, %s698
          %s700 = smul.addr %s30, 128
          %s701 = scalar_lea.hbm %s7, %s700
          %s703 = sshll.u32 %s693, 4
          %s704 = int_to_ptr.vmem [resolvable:$true] %s703
          %706 = dma.vmem_to_hbm [thread:$0]  %s704, 128, %s701, %s690
        $region76: #{tpu_custom_call.1} parent=47 // pred_fallthru
          _
      $region48: #{tpu_custom_call.1} parent=5 // pred_fallthru
        _
      %p707 = scmp.le.s32.totalorder 2, %s21
      // Predicated region
      $region77: #{tpu_custom_call.1} parent=5 // pred_check
        %p708 = pneg %p707
      $region78: #{tpu_custom_call.1} parent=5 // pred_check_branch
        %710 = sbr.rel (%p708) target = $region80
      $region79: #{tpu_custom_call.1} parent=5 // pred_region
        %s711 = ssub.s32 %s21, 2
        // Predicated region
        $region81: #{tpu_custom_call.1} parent=79 // pred_check
          %p712 = pneg %p238
        $region82: #{tpu_custom_call.1} parent=79 // pred_check_branch
          %714 = sbr.rel (%p712) target = $region84
        $region83: #{tpu_custom_call.1} parent=79 // pred_region
          %s715 = sand.u32 %s223, 1
          %s716 = scalar_lea.sflag [#allocation6], %s715
          %s717 = sand.u32 %s223, 1
          %s718 = smul.addr %s717, 8
          %s719 = scalar_lea.vmem [#allocation12], %s718
          %720 = dma.done %s716, 128
        $region84: #{tpu_custom_call.1} parent=79 // pred_fallthru
          _
      $region80: #{tpu_custom_call.1} parent=5 // pred_fallthru
        _
    $region6: #{tpu_custom_call.1} parent=1 // loop_footer
      %s25 = sadd.s32 1, %s21
    $region7: #{tpu_custom_call.1} parent=1 // loop_footer_branch
      %20 = sbr.rel target = $region3
    $region8: #{tpu_custom_call.1} parent=1 // loop_exit
      _
    %721 = vsyncpa [#allocation5], 1
    %s722 = scalar_lea.sflag [#allocation5], 1
    %723 = vsyncpa %s722, 1
    %724 = vsyncpa [#allocation8], 1
    %s725 = scalar_lea.sflag [#allocation8], 1
    %726 = vsyncpa %s725, 1
    %727 = vsyncpa [#allocation11], 1
    %728 = vsyncpa [#allocation6], 1
    %s729 = scalar_lea.sflag [#allocation6], 1
    %730 = vsyncpa %s729, 1

</llo_original>
